<compile_context>
chip_gen: v7x
topology: tpu7x:2x2x1
jax: 0.10.0
libtpu: 0.0.40
codegen_flags: <defaults>
</compile_context>

<pallas_src>
import jax
import jax.numpy as jnp
from jax.experimental import pallas as pl
from jax.experimental.pallas import tpu as pltpu


def _dropout_apply_kernel(m_ref, u_ref, v_ref, ou_ref, ov_ref):
    """Multiply (tm, r) tiles of u and v by per-row 0/1 multipliers.

    m_ref: (tm, 2) tile of 0/1 multipliers in the data dtype
           (column 0 = left mask for u, column 1 = right mask for v).
    """
    m = m_ref[...]                               # (tm, 2)
    ou_ref[...] = u_ref[...] * m[:, 0:1]         # (tm, r) * (tm, 1) broadcast
    ov_ref[...] = v_ref[...] * m[:, 1:2]


def _pick_tile_rows(M, r, itemsize):
    """Row-tile size for the flattened (M, r) view.

    Byte-targeted (~1 MiB per data array per step) rather than row-capped;
    row granularity follows the dtype's sublane packing (8 f32 / 16 bf16 /
    32 int8); total double-buffered VMEM (4 data blocks + the lane-padded
    mask block) stays within ~12 MiB; prefers >= 8 grid steps when the
    problem is large enough (v7x megacore balance) and a tile that divides M
    (no padded trailing block).
    """
    gran = max(8, 32 // itemsize)
    if M <= gran:
        return M                                  # block == full first dim

    def rnd(x):
        return max(gran, (x // gran) * gran)

    row_bytes = r * itemsize                      # one row of one data array
    mask_row_bytes = 128 * itemsize               # mask rows lane-pad to 128 in VMEM
    step_bytes = 2 * (4 * row_bytes + mask_row_bytes)   # double-buffered / row
    target = rnd(min((1 << 20) // max(row_bytes, 1),    # ~1 MiB per data block
                     (12 << 20) // step_bytes,          # ~12 MiB total footprint
                     M))
    floor = min(rnd((256 << 10) // max(row_bytes, 1)), target)

    nsteps = pl.cdiv(M, target)
    if 2 <= nsteps < 8:
        # v7x has 2 TensorCores sharing the "parallel" grid axis: prefer >= 8
        # steps for load balance as long as each step stays >= ~256 KiB.
        target = max(floor, rnd(pl.cdiv(M, 8)))

    best = 0
    t = gran
    while t <= target:                            # trace-time only
        if M % t == 0:
            best = t
        t += gran
    return best if best * 2 >= target else target


def equiv_dropout(u, v, p=0.5, training=True, seed=0):
    """Pallas implementation of EquivDropout.forward(u, v)."""
    b, l, n, r = u.shape
    assert v.shape == (b, l, n, r)
    assert u.dtype == v.dtype
    M = b * l * n

    if not training:
        # Eval: plain JAX scale — XLA fuses it into producers/consumers
        # instead of forcing a full HBM round trip through a Pallas call.
        scale = jnp.asarray(1.0 - p, dtype=u.dtype)
        return u * scale, v * scale

    # Per-(b,l,n) keep decisions, broadcast over r (torch's (b,l,n,1) masks).
    # keep iff uniform[0,1) > p  =>  keep probability exactly 1 - p.
    # Generated lane-dense over (M, 2) by XLA; HBM cost is M*2 elements vs.
    # 4*M*r moved by the kernel, i.e. < 1% extra for r >= 128.
    key = jax.random.PRNGKey(seed)
    keep = jax.random.uniform(key, (M, 2), dtype=jnp.float32) > p
    masks = keep.astype(u.dtype)                  # 0/1 multipliers

    u2 = u.reshape(M, r)
    v2 = v.reshape(M, r)

    tm = _pick_tile_rows(M, r, u2.dtype.itemsize)
    grid = (pl.cdiv(M, tm),)
    data_spec = pl.BlockSpec((tm, r), lambda i: (i, 0))
    mask_spec = pl.BlockSpec((tm, 2), lambda i: (i, 0))

    nbytes_data = (u2.size + v2.size) * u2.dtype.itemsize
    cost = pl.CostEstimate(
        flops=2 * M * r,
        transcendentals=0,
        bytes_accessed=2 * nbytes_data + masks.size * masks.dtype.itemsize,
    )

    ou, ov = pl.pallas_call(
        _dropout_apply_kernel,
        out_shape=(jax.ShapeDtypeStruct((M, r), u.dtype),
                   jax.ShapeDtypeStruct((M, r), v.dtype)),
        grid=grid,
        in_specs=[mask_spec, data_spec, data_spec],
        out_specs=(data_spec, data_spec),
        compiler_params=pltpu.CompilerParams(
            dimension_semantics=("parallel",),
            vmem_limit_bytes=32 * 1024 * 1024,
        ),
        cost_estimate=cost,
    )(masks, u2, v2)

    return ou.reshape(b, l, n, r), ov.reshape(b, l, n, r)


if __name__ == "__main__":
    p = 0.5

    def rowwise_kept(out, x, r):
        out2 = out.reshape(-1, r)
        x2 = x.reshape(-1, r)
        kept = jnp.all(out2 == x2, axis=-1)
        dropped = jnp.all(out2 == 0.0, axis=-1)
        assert bool(jnp.all(kept | dropped)), "mask not constant along r"
        return kept

    # ---- case 1: (b, l, n, r) = (2, 3, 8, 128); single-block grid ----
    b, l, n, r = 2, 3, 8, 128
    M = b * l * n
    ku, kv = jax.random.split(jax.random.PRNGKey(0))
    u = jax.random.normal(ku, (b, l, n, r), dtype=jnp.float32)
    v = jax.random.normal(kv, (b, l, n, r), dtype=jnp.float32)

    # eval mode: out = x * (1 - p)
    ou_e, ov_e = equiv_dropout(u, v, p=p, training=False)
    jax.block_until_ready((ou_e, ov_e))
    assert jnp.allclose(ou_e, u * (1.0 - p), atol=1e-6)
    assert jnp.allclose(ov_e, v * (1.0 - p), atol=1e-6)

    # training mode: per-(b,l,n) Bernoulli mask broadcast over r
    seed = 1234
    ou_t, ov_t = equiv_dropout(u, v, p=p, training=True, seed=seed)
    jax.block_until_ready((ou_t, ov_t))

    kept_u = rowwise_kept(ou_t, u, r)
    kept_v = rowwise_kept(ov_t, v, r)
    assert bool(jnp.any(kept_u)) and bool(jnp.any(~kept_u))
    assert bool(jnp.any(kept_v)) and bool(jnp.any(~kept_v))
    assert bool(jnp.any(kept_u != kept_v))     # left/right are independent draws

    # exact pure-JAX reference (same RNG stream as the wrapper)
    keep_ref = (jax.random.uniform(jax.random.PRNGKey(seed), (M, 2),
                                   dtype=jnp.float32) > p).astype(u.dtype)
    ref_u = (u.reshape(M, r) * keep_ref[:, 0:1]).reshape(u.shape)
    ref_v = (v.reshape(M, r) * keep_ref[:, 1:2]).reshape(v.shape)
    assert bool(jnp.all(ou_t == ref_u)) and bool(jnp.all(ov_t == ref_v))

    # ---- case 2: M = 35 rows -> multi-step grid with a padded tail block ----
    b2, l2, n2, r2 = 1, 5, 7, 128
    M2 = b2 * l2 * n2
    ku2, kv2 = jax.random.split(jax.random.PRNGKey(1))
    ub = jax.random.normal(ku2, (b2, l2, n2, r2), dtype=jnp.float32)
    vb = jax.random.normal(kv2, (b2, l2, n2, r2), dtype=jnp.float32)
    oub, ovb = equiv_dropout(ub, vb, p=p, training=True, seed=7)
    jax.block_until_ready((oub, ovb))
    assert oub.shape == ub.shape and ovb.shape == vb.shape
    rowwise_kept(oub, ub, r2)
    rowwise_kept(ovb, vb, r2)
    keep_ref2 = (jax.random.uniform(jax.random.PRNGKey(7), (M2, 2),
                                    dtype=jnp.float32) > p).astype(ub.dtype)
    ref_u2 = (ub.reshape(M2, r2) * keep_ref2[:, 0:1]).reshape(ub.shape)
    ref_v2 = (vb.reshape(M2, r2) * keep_ref2[:, 1:2]).reshape(vb.shape)
    assert bool(jnp.all(oub == ref_u2)) and bool(jnp.all(ovb == ref_v2))

    print("KERNEL_OK")
</pallas_src>

<mosaic_0001>
module attributes {stable_mosaic.version = 11 : i64} {
  func.func @_dropout_apply_kernel(%arg0: i32, %arg1: memref<48x2xf32, #tpu.memory_space<vmem>>, %arg2: memref<48x128xf32, #tpu.memory_space<vmem>>, %arg3: memref<48x128xf32, #tpu.memory_space<vmem>>, %arg4: memref<48x128xf32, #tpu.memory_space<vmem>>, %arg5: memref<48x128xf32, #tpu.memory_space<vmem>>) attributes {dimension_semantics = [#tpu.dimension_semantics<parallel>], iteration_bounds = array<i64: 1>, scalar_prefetch = 0 : i64, scratch_operands = 0 : i64, tpu.core_type = #tpu.core_type<tc>, window_params = [{transform_indices = @transform_0, window_bounds = array<i64: 48, 2>}, {transform_indices = @transform_1, window_bounds = array<i64: 48, 128>}, {transform_indices = @transform_2, window_bounds = array<i64: 48, 128>}, {transform_indices = @transform_3, window_bounds = array<i64: 48, 128>}, {transform_indices = @transform_4, window_bounds = array<i64: 48, 128>}]} {
    %c0 = arith.constant 0 : index
    %c0_0 = arith.constant 0 : index
    %0 = vector.load %arg1[%c0, %c0_0] : memref<48x2xf32, #tpu.memory_space<vmem>>, vector<48x2xf32>
    %c0_1 = arith.constant 0 : index
    %c0_2 = arith.constant 0 : index
    %1 = vector.load %arg2[%c0_1, %c0_2] : memref<48x128xf32, #tpu.memory_space<vmem>>, vector<48x128xf32>
    %2 = vector.extract_strided_slice %0 {offsets = [0, 0], sizes = [48, 1], strides = [1, 1]} : vector<48x2xf32> to vector<48x1xf32>
    %3 = vector.broadcast %2 : vector<48x1xf32> to vector<48x128xf32>
    %4 = arith.mulf %1, %3 : vector<48x128xf32>
    %c0_3 = arith.constant 0 : index
    %c0_4 = arith.constant 0 : index
    %5 = vector.load %arg4[%c0_3, %c0_4] : memref<48x128xf32, #tpu.memory_space<vmem>>, vector<48x128xf32>
    tpu.vector_store %arg4[%c0_3, %c0_4], %4 {strides = array<i32>} : memref<48x128xf32, #tpu.memory_space<vmem>>, vector<48x128xf32>,
    %c0_5 = arith.constant 0 : index
    %c0_6 = arith.constant 0 : index
    %6 = vector.load %arg3[%c0_5, %c0_6] : memref<48x128xf32, #tpu.memory_space<vmem>>, vector<48x128xf32>
    %7 = vector.extract_strided_slice %0 {offsets = [0, 1], sizes = [48, 1], strides = [1, 1]} : vector<48x2xf32> to vector<48x1xf32>
    %8 = vector.broadcast %7 : vector<48x1xf32> to vector<48x128xf32>
    %9 = arith.mulf %6, %8 : vector<48x128xf32>
    %c0_7 = arith.constant 0 : index
    %c0_8 = arith.constant 0 : index
    %10 = vector.load %arg5[%c0_7, %c0_8] : memref<48x128xf32, #tpu.memory_space<vmem>>, vector<48x128xf32>
    tpu.vector_store %arg5[%c0_7, %c0_8], %9 {strides = array<i32>} : memref<48x128xf32, #tpu.memory_space<vmem>>, vector<48x128xf32>,
    return
  }
  func.func @transform_0(%arg0: i32) -> (i32, i32) {
    %c0_i32 = arith.constant 0 : i32
    %c0_i32_0 = arith.constant 0 : i32
    return %arg0, %c0_i32 : i32, i32
  }
  func.func @transform_1(%arg0: i32) -> (i32, i32) {
    %c0_i32 = arith.constant 0 : i32
    %c0_i32_0 = arith.constant 0 : i32
    return %arg0, %c0_i32 : i32, i32
  }
  func.func @transform_2(%arg0: i32) -> (i32, i32) {
    %c0_i32 = arith.constant 0 : i32
    %c0_i32_0 = arith.constant 0 : i32
    return %arg0, %c0_i32 : i32, i32
  }
  func.func @transform_3(%arg0: i32) -> (i32, i32) {
    %c0_i32 = arith.constant 0 : i32
    %c0_i32_0 = arith.constant 0 : i32
    return %arg0, %c0_i32 : i32, i32
  }
  func.func @transform_4(%arg0: i32) -> (i32, i32) {
    %c0_i32 = arith.constant 0 : i32
    %c0_i32_0 = arith.constant 0 : i32
    return %arg0, %c0_i32 : i32, i32
  }
}

</mosaic_0001>

<llo_original>
// kernel: tpu_custom_call.1
$region0: #{tpu_custom_call.1}
  #allocation0 [shape = 'u32[]', space=smem, size = 0x4, offset = 0x4, fixed_abs, tag = 'smem constant byte address 0x4 - core index']
  #allocation1 [shape = 'u32[144,128]{1,0:T(1,128)}', space=vmem, size = 0x12000, scoped, tag = 'internal scratch']
  %s0 = inlined_call_operand.vmem [shape: f32[48,2], index: 0, kind: input, shape index: {}]
  %s1 = inlined_call_operand.vmem [shape: f32[48,128], index: 1, kind: input, shape index: {}]
  %s2 = inlined_call_operand.hbm [shape: f32[48,128], index: 2, kind: input, shape index: {}]
  %s3 = inlined_call_operand.hbm [shape: f32[48,128], index: 3, kind: output, shape index: {0}]
  %s4 = inlined_call_operand.hbm [shape: f32[48,128], index: 4, kind: output, shape index: {1}]
  %5 = xla_tuple %s3, %s4
  %s6 = sld [smem:[#allocation0]]
  $region34: #{tpu_custom_call.1} parent=0
    _
  %s8 = ssub.s32 1, %s6
  %s9 = scalar_select 0, %s8, %s6
  $region1: #{tpu_custom_call.1} parent=0
    #allocation2 [shape = 'u8[24576]{0}', space=vmem, size = 0x6000, scoped, tag = 'input window, operand 2, single buffered']
    #allocation3 [shape = 's32[1]{0}', space=sflag, size = 0x4, scoped, tag = 'scoped memory for tpu_custom_call.1']
    #allocation4 [shape = 's32[1]{0}', space=sflag, size = 0x4, scoped, tag = 'scoped memory for tpu_custom_call.1']
    #allocation5 [shape = 'u8[24576]{0}', space=vmem, size = 0x6000, scoped, tag = 'output window, operand 0, single buffered']
    #allocation6 [shape = 'u8[24576]{0}', space=vmem, size = 0x6000, scoped, tag = 'output window, operand 1, single buffered']
    #allocation7 [shape = 's32[1]{0}', space=sflag, size = 0x4, scoped, tag = 'scoped memory for tpu_custom_call.1']
    %10 = vsyncpa [#allocation3], 0
    %11 = vsyncpa [#allocation4], 0
    %12 = vsyncpa [#allocation7], 0
    // Predicated region
    $region2: #{tpu_custom_call.1} parent=1 // pred_check
      _
    $region3: #{tpu_custom_call.1} parent=1 // pred_check_branch
      %14 = sbr.rel (0) target = $region5
    $region4: #{tpu_custom_call.1} parent=1 // pred_region
      _
    $region5: #{tpu_custom_call.1} parent=1 // pred_fallthru
      _
    // Predicated region
    $region6: #{tpu_custom_call.1} parent=1 // pred_check
      _
    $region7: #{tpu_custom_call.1} parent=1 // pred_check_branch
      %16 = sbr.rel (0) target = $region9
    $region8: #{tpu_custom_call.1} parent=1 // pred_region
      _
    $region9: #{tpu_custom_call.1} parent=1 // pred_fallthru
      _
    // Predicated region
    $region10: #{tpu_custom_call.1} parent=1 // pred_check
      _
    $region11: #{tpu_custom_call.1} parent=1 // pred_check_branch
      %18 = sbr.rel (0) target = $region13
    $region12: #{tpu_custom_call.1} parent=1 // pred_region
      %s20 = ssub.s32 768, 768
      %21 = vsyncadd [#allocation3], %s20
      %s22 = sshll.u32 [#allocation2], 4
      %s23 = int_to_ptr.vmem [resolvable:$true] %s22
      %28 = dma.hbm_to_vmem [thread:$0]  %s2, 768, %s23, [#allocation3], 128, 128, 8
    $region13: #{tpu_custom_call.1} parent=1 // pred_fallthru
      _
    // Predicated region
    $region14: #{tpu_custom_call.1} parent=1 // pred_check
      _
    $region15: #{tpu_custom_call.1} parent=1 // pred_check_branch
      %30 = sbr.rel (0) target = $region17
    $region16: #{tpu_custom_call.1} parent=1 // pred_region
      %31 = dma.done [#allocation3], 768
    $region17: #{tpu_custom_call.1} parent=1 // pred_fallthru
      _
    %v32 = vld [vmem:[%s0] sm:$0xff]
    %v33 = vld [vmem:[%s0 + $0x8] sm:$0xff]
    %v34 = vld [vmem:[%s0 + $0x10] sm:$0xff]
    %v35 = vld [vmem:[%s0 + $0x18] sm:$0xff]
    %v36 = vld [vmem:[%s0 + $0x20] sm:$0xff]
    %v37 = vld [vmem:[%s0 + $0x28] sm:$0xff]
    %v38 = vld [vmem:[%s1] sm:$0xff]
    %v39 = vld [vmem:[%s1 + $0x8] sm:$0xff]
    %v40 = vld [vmem:[%s1 + $0x10] sm:$0xff]
    %v41 = vld [vmem:[%s1 + $0x18] sm:$0xff]
    %v42 = vld [vmem:[%s1 + $0x20] sm:$0xff]
    %v43 = vld [vmem:[%s1 + $0x28] sm:$0xff]
    %45 = vset.pattern.permute.xlu0 0
    %46 = vperm.xlu0 %45, %v32
    %v47 = vpop.permute.xlu0 %46
    %50 = vset.pattern.permute.xlu0 0
    %51 = vperm.xlu0 %50, %v33
    %v52 = vpop.permute.xlu0 %51
    %55 = vset.pattern.permute.xlu0 0
    %56 = vperm.xlu0 %55, %v34
    %v57 = vpop.permute.xlu0 %56
    %60 = vset.pattern.permute.xlu0 0
    %61 = vperm.xlu0 %60, %v35
    %v62 = vpop.permute.xlu0 %61
    %65 = vset.pattern.permute.xlu0 0
    %66 = vperm.xlu0 %65, %v36
    %v67 = vpop.permute.xlu0 %66
    %70 = vset.pattern.permute.xlu0 0
    %71 = vperm.xlu0 %70, %v37
    %v72 = vpop.permute.xlu0 %71
    %v74 = vmul.f32 %v38, %v47
    %v75 = vmul.f32 %v39, %v52
    %v76 = vmul.f32 %v40, %v57
    %v77 = vmul.f32 %v41, %v62
    %v78 = vmul.f32 %v42, %v67
    %v79 = vmul.f32 %v43, %v72
    %80 = vst [vmem:[#allocation5] sm:$0xff] %v74
    %81 = vst [vmem:[#allocation5 + $0x8] sm:$0xff] %v75
    %82 = vst [vmem:[#allocation5 + $0x10] sm:$0xff] %v76
    %83 = vst [vmem:[#allocation5 + $0x18] sm:$0xff] %v77
    %84 = vst [vmem:[#allocation5 + $0x20] sm:$0xff] %v78
    %85 = vst [vmem:[#allocation5 + $0x28] sm:$0xff] %v79
    %v86 = vld [vmem:[#allocation2] sm:$0xff]
    %v87 = vld [vmem:[#allocation2 + $0x8] sm:$0xff]
    %v88 = vld [vmem:[#allocation2 + $0x10] sm:$0xff]
    %v89 = vld [vmem:[#allocation2 + $0x18] sm:$0xff]
    %v90 = vld [vmem:[#allocation2 + $0x20] sm:$0xff]
    %v91 = vld [vmem:[#allocation2 + $0x28] sm:$0xff]
    %92 = vset.pattern.permute.xlu0 1
    %93 = vperm.xlu0 %92, %v32
    %v94 = vpop.permute.xlu0 %93
    %96 = vset.pattern.permute.xlu0 1
    %97 = vperm.xlu0 %96, %v33
    %v98 = vpop.permute.xlu0 %97
    %100 = vset.pattern.permute.xlu0 1
    %101 = vperm.xlu0 %100, %v34
    %v102 = vpop.permute.xlu0 %101
    %104 = vset.pattern.permute.xlu0 1
    %105 = vperm.xlu0 %104, %v35
    %v106 = vpop.permute.xlu0 %105
    %108 = vset.pattern.permute.xlu0 1
    %109 = vperm.xlu0 %108, %v36
    %v110 = vpop.permute.xlu0 %109
    %112 = vset.pattern.permute.xlu0 1
    %113 = vperm.xlu0 %112, %v37
    %v114 = vpop.permute.xlu0 %113
    %v116 = vmul.f32 %v86, %v94
    %v117 = vmul.f32 %v87, %v98
    %v118 = vmul.f32 %v88, %v102
    %v119 = vmul.f32 %v89, %v106
    %v120 = vmul.f32 %v90, %v110
    %v121 = vmul.f32 %v91, %v114
    %122 = vst [vmem:[#allocation6] sm:$0xff] %v116
    %123 = vst [vmem:[#allocation6 + $0x8] sm:$0xff] %v117
    %124 = vst [vmem:[#allocation6 + $0x10] sm:$0xff] %v118
    %125 = vst [vmem:[#allocation6 + $0x18] sm:$0xff] %v119
    %126 = vst [vmem:[#allocation6 + $0x20] sm:$0xff] %v120
    %127 = vst [vmem:[#allocation6 + $0x28] sm:$0xff] %v121
    // Predicated region
    $region18: #{tpu_custom_call.1} parent=1 // pred_check
      _
    $region19: #{tpu_custom_call.1} parent=1 // pred_check_branch
      %129 = sbr.rel (0) target = $region21
    $region20: #{tpu_custom_call.1} parent=1 // pred_region
      %s131 = ssub.s32 768, 768
      %132 = vsyncadd [#allocation4], %s131
      %s133 = sshll.u32 [#allocation5], 4
      %s134 = int_to_ptr.vmem [resolvable:$true] %s133
      %139 = dma.vmem_to_hbm [thread:$0]  %s134, 768, %s3, [#allocation4], 128, 128, 8
    $region21: #{tpu_custom_call.1} parent=1 // pred_fallthru
      _
    // Predicated region
    $region22: #{tpu_custom_call.1} parent=1 // pred_check
      _
    $region23: #{tpu_custom_call.1} parent=1 // pred_check_branch
      %141 = sbr.rel (0) target = $region25
    $region24: #{tpu_custom_call.1} parent=1 // pred_region
      %s143 = ssub.s32 768, 768
      %144 = vsyncadd [#allocation7], %s143
      %s145 = sshll.u32 [#allocation6], 4
      %s146 = int_to_ptr.vmem [resolvable:$true] %s145
      %151 = dma.vmem_to_hbm [thread:$0]  %s146, 768, %s4, [#allocation7], 128, 128, 8
    $region25: #{tpu_custom_call.1} parent=1 // pred_fallthru
      _
    // Predicated region
    $region26: #{tpu_custom_call.1} parent=1 // pred_check
      _
    $region27: #{tpu_custom_call.1} parent=1 // pred_check_branch
      %153 = sbr.rel (0) target = $region29
    $region28: #{tpu_custom_call.1} parent=1 // pred_region
      %154 = dma.done [#allocation4], 768
    $region29: #{tpu_custom_call.1} parent=1 // pred_fallthru
      _
    // Predicated region
    $region30: #{tpu_custom_call.1} parent=1 // pred_check
      _
    $region31: #{tpu_custom_call.1} parent=1 // pred_check_branch
      %156 = sbr.rel (0) target = $region33
    $region32: #{tpu_custom_call.1} parent=1 // pred_region
      %157 = dma.done [#allocation7], 768
    $region33: #{tpu_custom_call.1} parent=1 // pred_fallthru
      _
    %158 = vsyncpa [#allocation3], 1
    %159 = vsyncpa [#allocation4], 1
    %160 = vsyncpa [#allocation7], 1

</llo_original>
